<compile_context>
chip_gen: v7x
topology: tpu7x:2x2x1
jax: 0.10.0
libtpu: 0.0.40
codegen_flags: <defaults>
</compile_context>

<pallas_src>
import functools

import jax
import jax.numpy as jnp
from jax import lax
from jax.experimental import pallas as pl
from jax.experimental.pallas import tpu as pltpu


def _round_up(n, m):
    return (n + m - 1) // m * m


def gated_recurrent_kernel(x_ref, wx_ref, bzh_ref, wh_ref, wy_ref, by_ref,
                           y_ref, h_ref, gx_ref,
                           *, t_chunk, batch_tile, seq_len, rec_dim):
    """One grid step = one (batch-tile, time-chunk).

    x_ref   : (Tc, Bt, D)   bf16, time-major input chunk
    wx_ref  : (D, 2Rp)      bf16, packed [Wxz | Wxh]
    bzh_ref : (1, 2Rp)      f32,  packed [bz | bh]
    wh_ref  : (Rp, 2Rp)     bf16, packed [Whz | Whh]
    wy_ref  : (Rp, Op)      bf16, output projection (stored (in, out))
    by_ref  : (1, Op)       f32
    y_ref   : (Bt, Op)      f32 output block (written on last time chunk)
    h_ref   : (Bt, Rp)      f32 hidden-state carry (scratch)
    gx_ref  : (Tc*Bt, 2Rp)  f32 per-chunk input-projection scratch
    """
    c = pl.program_id(1)                      # sequential time-chunk index

    @pl.when(c == 0)
    def _init():
        h_ref[...] = jnp.zeros_like(h_ref)

    # ---- time-parallel input projection for the whole chunk: one MXU dot ---
    # (Tc, Bt, D) -> (Tc*Bt, D); Bt is a multiple of 8 so the merge is
    # layout-preserving.
    xm = x_ref[...].reshape(t_chunk * batch_tile, -1)            # bf16
    gx_ref[...] = (jnp.dot(xm, wx_ref[...],
                           preferred_element_type=jnp.float32)
                   + bzh_ref[...])                               # (Tc*Bt, 2Rp) f32

    wh = wh_ref[...]                                             # (Rp, 2Rp) bf16

    def step(i, h):
        row = pl.multiple_of(i * batch_tile, batch_tile)
        gx = gx_ref[pl.ds(row, batch_tile), :]                   # (Bt, 2Rp) f32
        pre = gx + jnp.dot(h.astype(wh.dtype), wh,
                           preferred_element_type=jnp.float32)   # (Bt, 2Rp) f32
        # sigmoid via a single EUP op:  1 - z = 0.5 * (1 - tanh(pre_z / 2))
        one_minus_z = 0.5 - 0.5 * jnp.tanh(0.5 * pre[:, :rec_dim])
        hb = jnp.maximum(pre[:, rec_dim:], 0.0)
        h_new = h + one_minus_z * (hb - h)        # == z*h + (1-z)*hb
        if seq_len % t_chunk == 0:                # static: no padded timesteps
            return h_new
        t_global = c * t_chunk + i                # mask padded tail timesteps
        return jnp.where(t_global < seq_len, h_new, h)

    h = lax.fori_loop(0, t_chunk, step, h_ref[...],
                      unroll=min(8, t_chunk))     # bounded unroll (vreg pressure)
    h_ref[...] = h

    @pl.when(c == pl.num_programs(1) - 1)
    def _epilogue():
        y_ref[...] = (jnp.dot(h.astype(wy_ref.dtype), wy_ref[...],
                              preferred_element_type=jnp.float32)
                      + by_ref[...]).astype(y_ref.dtype)


def gated_arch_forward(x, params, *, t_chunk=None, batch_tile=None,
                       matmul_dtype=jnp.bfloat16,
                       vmem_budget_bytes=48 * 1024 * 1024,
                       weight_buffers=2):
    """x: (B, T, D) float32 -> (B, O) float32."""
    B, T, D = x.shape
    R = params["whh"].shape[0]
    O = params["wy"].shape[1]

    Rp = _round_up(R, 128)                 # lane-dense hidden / gate dims
    Op = _round_up(O, 128)                 # lane-dense output dim
    Bp = _round_up(B, 8)                   # sublane-dense batch

    # ---- batch tiling: exactly 2 tiles when big enough (v7x megacore),
    # otherwise one tile so the per-step matmul M stays as large as possible.
    if batch_tile is None:
        Bt = Bp // 2 if (Bp >= 16 and Bp % 16 == 0) else Bp
    else:
        Bt = batch_tile
        if Bt % 8 or Bp % Bt:
            raise ValueError("batch_tile must be a multiple of 8 dividing the "
                             "padded batch")
    n_bt = Bp // Bt

    # ---- pack, pad and cast weights (pad columns/rows with zeros) ----------
    def pad2(a, r, c):
        return jnp.pad(a, ((0, r - a.shape[0]), (0, c - a.shape[1])))

    wx = jnp.concatenate([pad2(params["wxz"], D, Rp),
                          pad2(params["wxh"], D, Rp)], axis=1).astype(matmul_dtype)   # (D, 2Rp)
    wh = jnp.concatenate([pad2(params["whz"], Rp, Rp),
                          pad2(params["whh"], Rp, Rp)], axis=1).astype(matmul_dtype)  # (Rp, 2Rp)
    wy = pad2(params["wy"], Rp, Op).astype(matmul_dtype)                              # (Rp, Op)
    bzh = jnp.concatenate([pad2(params["bz"], 1, Rp),
                           pad2(params["bh"], 1, Rp)], axis=1)                        # (1, 2Rp) f32
    by = pad2(params["by"], 1, Op)                                                    # (1, Op) f32

    # ---- time-major bf16 input stream (batch padded to a multiple of 8) ----
    xt = jnp.transpose(x, (1, 0, 2)).astype(matmul_dtype)        # (T, B, D)
    if Bp != B:
        xt = jnp.pad(xt, ((0, 0), (0, Bp - B), (0, 0)))          # (T, Bp, D)

    # ---- VMEM-budget-driven time chunk --------------------------------------
    # per-chunk weight residency (bytes), double- or single-buffered
    bytes_weights = weight_buffers * (2 * (D * 2 * Rp + Rp * 2 * Rp + Rp * Op)
                                      + 4 * (2 * Rp + Op))
    bytes_fixed = bytes_weights + Bt * Rp * 4 + 2 * Bt * Op * 4  # h carry + y out
    per_t_bytes = Bt * (2 * D * 2          # x double buffer (bf16)
                        + 2 * Rp * 4)      # gx scratch (f32, 2Rp cols)
    budget_left = vmem_budget_bytes - bytes_fixed
    tc_budget = max(1, budget_left // per_t_bytes) if budget_left > 0 else 1
    if t_chunk is None:
        Tc = int(max(1, min(T, tc_budget)))
    else:
        Tc = int(max(1, min(t_chunk, T)))
    n_tc = pl.cdiv(T, Tc)

    const = lambda b, c: (0, 0)
    if weight_buffers == 2:
        wspec = lambda shape: pl.BlockSpec(shape, const)
    else:
        # single-buffered grid-invariant weights (VMEM headroom, esp. v7x)
        wspec = lambda shape: pl.BlockSpec(shape, const,
                                           pipeline_mode=pl.Buffered(weight_buffers))

    kernel = functools.partial(gated_recurrent_kernel,
                               t_chunk=Tc, batch_tile=Bt,
                               seq_len=T, rec_dim=Rp)

    y_pad = pl.pallas_call(
        kernel,
        out_shape=jax.ShapeDtypeStruct((Bp, Op), jnp.float32),
        grid_spec=pltpu.PrefetchScalarGridSpec(
            num_scalar_prefetch=0,
            grid=(n_bt, n_tc),
            in_specs=[
                pl.BlockSpec((Tc, Bt, D), lambda b, c: (c, b, 0)),  # x chunk
                wspec((D, 2 * Rp)),     # [Wxz | Wxh]  bf16
                wspec((1, 2 * Rp)),     # [bz  | bh ]  f32
                wspec((Rp, 2 * Rp)),    # [Whz | Whh]  bf16
                wspec((Rp, Op)),        # Wy (stored (in, out))  bf16
                wspec((1, Op)),         # by  f32
            ],
            out_specs=pl.BlockSpec((Bt, Op), lambda b, c: (b, 0)),
            scratch_shapes=[
                pltpu.VMEM((Bt, Rp), jnp.float32),              # h carry
                pltpu.VMEM((Tc * Bt, 2 * Rp), jnp.float32),     # per-chunk gx
            ],
        ),
        compiler_params=pltpu.CompilerParams(
            dimension_semantics=("parallel", "arbitrary"),
            vmem_limit_bytes=int(vmem_budget_bytes)),
    )(xt, wx, bzh, wh, wy, by)

    return y_pad[:B, :O]


def init_params(key, input_dim, recurrent_dim, output_dim):
    """PyTorch-Linear-style uniform init; weights stored as (in, out)."""
    ks = jax.random.split(key, 7)

    def unif(k, shape, fan_in):
        bound = 1.0 / jnp.sqrt(fan_in)
        return jax.random.uniform(k, shape, jnp.float32, -bound, bound)

    return {
        "wxh": unif(ks[0], (input_dim, recurrent_dim), input_dim),
        "bh":  unif(ks[1], (1, recurrent_dim), input_dim),
        "whh": unif(ks[2], (recurrent_dim, recurrent_dim), recurrent_dim),
        "wxz": unif(ks[3], (input_dim, recurrent_dim), input_dim),
        "bz":  unif(ks[4], (1, recurrent_dim), input_dim),
        "whz": unif(ks[5], (recurrent_dim, recurrent_dim), recurrent_dim),
        "wy":  unif(ks[6], (recurrent_dim, output_dim), recurrent_dim),
        "by":  jnp.zeros((1, output_dim), jnp.float32),
    }


def gated_arch_ref(x, params):
    """Pure-JAX f32 reference (mirrors the PyTorch forward)."""
    B = x.shape[0]
    R = params["whh"].shape[0]

    def step(h, xt):
        z = jax.nn.sigmoid(xt @ params["wxz"] + params["bz"] + h @ params["whz"])
        hb = jnp.maximum(xt @ params["wxh"] + params["bh"] + h @ params["whh"], 0.0)
        h = z * h + (1.0 - z) * hb
        return h, None

    h0 = jnp.zeros((B, R), jnp.float32)
    hT, _ = lax.scan(step, h0, jnp.transpose(x, (1, 0, 2)))
    return hT @ params["wy"] + params["by"]


if __name__ == "__main__":
    B, T, D_IN, R, O = 8, 8, 32, 32, 16

    key = jax.random.PRNGKey(0)
    k_x, k_p = jax.random.split(key)
    x = jax.random.normal(k_x, (B, T, D_IN), jnp.float32)
    params = init_params(k_p, D_IN, R, O)

    fwd = jax.jit(gated_arch_forward)
    y = jax.block_until_ready(fwd(x, params))
    y_expected = gated_arch_ref(x, params)

    assert y.shape == (B, O)
    # bf16 matmul operands (f32 accumulation) vs f32 reference -> loosened tol.
    assert jnp.allclose(y, y_expected, atol=3e-2, rtol=3e-2), "mismatch vs reference"
    print("KERNEL_OK")
</pallas_src>

<mosaic_0001>
module attributes {stable_mosaic.version = 11 : i64} {
  func.func @gated_recurrent_kernel(%arg0: i32, %arg1: i32, %arg2: memref<8x8x32xbf16, #tpu.memory_space<vmem>>, %arg3: memref<32x256xbf16, #tpu.memory_space<vmem>>, %arg4: memref<1x256xf32, #tpu.memory_space<vmem>>, %arg5: memref<128x256xbf16, #tpu.memory_space<vmem>>, %arg6: memref<128x128xbf16, #tpu.memory_space<vmem>>, %arg7: memref<1x128xf32, #tpu.memory_space<vmem>>, %arg8: memref<8x128xf32, #tpu.memory_space<vmem>>, %arg9: memref<8x128xf32, #tpu.memory_space<vmem>>, %arg10: memref<64x256xf32, #tpu.memory_space<vmem>>) attributes {dimension_semantics = [#tpu.dimension_semantics<parallel>, #tpu.dimension_semantics<arbitrary>], iteration_bounds = array<i64: 1, 1>, scalar_prefetch = 0 : i64, scratch_operands = 2 : i64, tpu.core_type = #tpu.core_type<tc>, window_params = [{transform_indices = @transform_0, window_bounds = array<i64: 8, 8, 32>}, {pipeline_mode = #tpu.pipeline_mode<synchronous>, transform_indices = @transform_1, window_bounds = array<i64: 32, 256>}, {pipeline_mode = #tpu.pipeline_mode<synchronous>, transform_indices = @transform_2, window_bounds = array<i64: 1, 256>}, {pipeline_mode = #tpu.pipeline_mode<synchronous>, transform_indices = @transform_3, window_bounds = array<i64: 128, 256>}, {pipeline_mode = #tpu.pipeline_mode<synchronous>, transform_indices = @transform_4, window_bounds = array<i64: 128, 128>}, {pipeline_mode = #tpu.pipeline_mode<synchronous>, transform_indices = @transform_5, window_bounds = array<i64: 1, 128>}, {transform_indices = @transform_6, window_bounds = array<i64: 8, 128>}]} {
    %c0_i32 = arith.constant 0 : i32
    %0 = arith.cmpi eq, %arg1, %c0_i32 : i32
    %1 = arith.extui %0 : i1 to i32
    %c0_i32_0 = arith.constant 0 : i32
    %2 = arith.cmpi ne, %1, %c0_i32_0 : i32
    scf.if %2 {
      %cst_74 = arith.constant 0.000000e+00 : f32
      %185 = vector.broadcast %cst_74 : f32 to vector<8x128xf32>
      %c0_75 = arith.constant 0 : index
      %c0_76 = arith.constant 0 : index
      %186 = vector.load %arg9[%c0_75, %c0_76] : memref<8x128xf32, #tpu.memory_space<vmem>>, vector<8x128xf32>
      tpu.vector_store %arg9[%c0_75, %c0_76], %185 {strides = array<i32>} : memref<8x128xf32, #tpu.memory_space<vmem>>, vector<8x128xf32>,
    } else {
    }
    %c0 = arith.constant 0 : index
    %c0_1 = arith.constant 0 : index
    %c0_2 = arith.constant 0 : index
    %3 = vector.load %arg2[%c0, %c0_1, %c0_2] : memref<8x8x32xbf16, #tpu.memory_space<vmem>>, vector<8x8x32xbf16>
    %4 = vector.shape_cast %3 : vector<8x8x32xbf16> to vector<64x32xbf16>
    %c0_3 = arith.constant 0 : index
    %c0_4 = arith.constant 0 : index
    %5 = vector.load %arg3[%c0_3, %c0_4] : memref<32x256xbf16, #tpu.memory_space<vmem>>, vector<32x256xbf16>
    %cst = arith.constant dense<0.000000e+00> : vector<64x256xf32>
    %6 = tpu.matmul %4, %5, %cst {dimension_numbers = #tpu.dot_dimension_numbers<[1], [0], [0], [1], [0, 0, 1, 1], [], []>} : vector<64x32xbf16>, vector<32x256xbf16>, vector<64x256xf32> -> vector<64x256xf32>
    %c0_5 = arith.constant 0 : index
    %c0_6 = arith.constant 0 : index
    %7 = vector.load %arg4[%c0_5, %c0_6] : memref<1x256xf32, #tpu.memory_space<vmem>>, vector<1x256xf32>
    %8 = vector.broadcast %7 : vector<1x256xf32> to vector<64x256xf32>
    %9 = arith.addf %6, %8 : vector<64x256xf32>
    %c0_7 = arith.constant 0 : index
    %c0_8 = arith.constant 0 : index
    %10 = vector.load %arg10[%c0_7, %c0_8] : memref<64x256xf32, #tpu.memory_space<vmem>>, vector<64x256xf32>
    tpu.vector_store %arg10[%c0_7, %c0_8], %9 {strides = array<i32>} : memref<64x256xf32, #tpu.memory_space<vmem>>, vector<64x256xf32>,
    %c0_9 = arith.constant 0 : index
    %c0_10 = arith.constant 0 : index
    %11 = vector.load %arg5[%c0_9, %c0_10] : memref<128x256xbf16, #tpu.memory_space<vmem>>, vector<128x256xbf16>
    %c0_11 = arith.constant 0 : index
    %c0_12 = arith.constant 0 : index
    %12 = vector.load %arg9[%c0_11, %c0_12] : memref<8x128xf32, #tpu.memory_space<vmem>>, vector<8x128xf32>
    %c0_i32_13 = arith.constant 0 : i32
    %c8_i32 = arith.constant 8 : i32
    %13 = arith.muli %c0_i32_13, %c8_i32 : i32
    %14 = tpu.assume_multiple %13, 8 : i32
    %15 = arith.index_cast %14 : i32 to index
    %c0_14 = arith.constant 0 : index
    %16 = vector.load %arg10[%15, %c0_14] : memref<64x256xf32, #tpu.memory_space<vmem>>, vector<8x256xf32>
    %17 = arith.truncf %12 : vector<8x128xf32> to vector<8x128xbf16>
    %cst_15 = arith.constant dense<0.000000e+00> : vector<8x256xf32>
    %18 = tpu.matmul %17, %11, %cst_15 {dimension_numbers = #tpu.dot_dimension_numbers<[1], [0], [0], [1], [0, 0, 1, 1], [], []>} : vector<8x128xbf16>, vector<128x256xbf16>, vector<8x256xf32> -> vector<8x256xf32>
    %19 = arith.addf %16, %18 : vector<8x256xf32>
    %20 = vector.extract_strided_slice %19 {offsets = [0, 0], sizes = [8, 128], strides = [1, 1]} : vector<8x256xf32> to vector<8x128xf32>
    %cst_16 = arith.constant 5.000000e-01 : f32
    %21 = vector.broadcast %cst_16 : f32 to vector<8x128xf32>
    %22 = arith.mulf %21, %20 : vector<8x128xf32>
    %23 = math.tanh %22 : vector<8x128xf32>
    %cst_17 = arith.constant 5.000000e-01 : f32
    %24 = vector.broadcast %cst_17 : f32 to vector<8x128xf32>
    %25 = arith.mulf %24, %23 : vector<8x128xf32>
    %cst_18 = arith.constant 5.000000e-01 : f32
    %26 = vector.broadcast %cst_18 : f32 to vector<8x128xf32>
    %27 = arith.subf %26, %25 : vector<8x128xf32>
    %28 = vector.extract_strided_slice %19 {offsets = [0, 128], sizes = [8, 128], strides = [1, 1]} : vector<8x256xf32> to vector<8x128xf32>
    %cst_19 = arith.constant 0.000000e+00 : f32
    %29 = vector.broadcast %cst_19 : f32 to vector<8x128xf32>
    %30 = arith.maximumf %28, %29 : vector<8x128xf32>
    %31 = arith.subf %30, %12 : vector<8x128xf32>
    %32 = arith.mulf %27, %31 : vector<8x128xf32>
    %33 = arith.addf %12, %32 : vector<8x128xf32>
    %c1_i32 = arith.constant 1 : i32
    %c8_i32_20 = arith.constant 8 : i32
    %34 = arith.muli %c1_i32, %c8_i32_20 : i32
    %35 = tpu.assume_multiple %34, 8 : i32
    %36 = arith.index_cast %35 : i32 to index
    %c0_21 = arith.constant 0 : index
    %37 = vector.load %arg10[%36, %c0_21] : memref<64x256xf32, #tpu.memory_space<vmem>>, vector<8x256xf32>
    %38 = arith.truncf %33 : vector<8x128xf32> to vector<8x128xbf16>
    %cst_22 = arith.constant dense<0.000000e+00> : vector<8x256xf32>
    %39 = tpu.matmul %38, %11, %cst_22 {dimension_numbers = #tpu.dot_dimension_numbers<[1], [0], [0], [1], [0, 0, 1, 1], [], []>} : vector<8x128xbf16>, vector<128x256xbf16>, vector<8x256xf32> -> vector<8x256xf32>
    %40 = arith.addf %37, %39 : vector<8x256xf32>
    %41 = vector.extract_strided_slice %40 {offsets = [0, 0], sizes = [8, 128], strides = [1, 1]} : vector<8x256xf32> to vector<8x128xf32>
    %cst_23 = arith.constant 5.000000e-01 : f32
    %42 = vector.broadcast %cst_23 : f32 to vector<8x128xf32>
    %43 = arith.mulf %42, %41 : vector<8x128xf32>
    %44 = math.tanh %43 : vector<8x128xf32>
    %cst_24 = arith.constant 5.000000e-01 : f32
    %45 = vector.broadcast %cst_24 : f32 to vector<8x128xf32>
    %46 = arith.mulf %45, %44 : vector<8x128xf32>
    %cst_25 = arith.constant 5.000000e-01 : f32
    %47 = vector.broadcast %cst_25 : f32 to vector<8x128xf32>
    %48 = arith.subf %47, %46 : vector<8x128xf32>
    %49 = vector.extract_strided_slice %40 {offsets = [0, 128], sizes = [8, 128], strides = [1, 1]} : vector<8x256xf32> to vector<8x128xf32>
    %cst_26 = arith.constant 0.000000e+00 : f32
    %50 = vector.broadcast %cst_26 : f32 to vector<8x128xf32>
    %51 = arith.maximumf %49, %50 : vector<8x128xf32>
    %52 = arith.subf %51, %33 : vector<8x128xf32>
    %53 = arith.mulf %48, %52 : vector<8x128xf32>
    %54 = arith.addf %33, %53 : vector<8x128xf32>
    %c2_i32 = arith.constant 2 : i32
    %c8_i32_27 = arith.constant 8 : i32
    %55 = arith.muli %c2_i32, %c8_i32_27 : i32
    %56 = tpu.assume_multiple %55, 8 : i32
    %57 = arith.index_cast %56 : i32 to index
    %c0_28 = arith.constant 0 : index
    %58 = vector.load %arg10[%57, %c0_28] : memref<64x256xf32, #tpu.memory_space<vmem>>, vector<8x256xf32>
    %59 = arith.truncf %54 : vector<8x128xf32> to vector<8x128xbf16>
    %cst_29 = arith.constant dense<0.000000e+00> : vector<8x256xf32>
    %60 = tpu.matmul %59, %11, %cst_29 {dimension_numbers = #tpu.dot_dimension_numbers<[1], [0], [0], [1], [0, 0, 1, 1], [], []>} : vector<8x128xbf16>, vector<128x256xbf16>, vector<8x256xf32> -> vector<8x256xf32>
    %61 = arith.addf %58, %60 : vector<8x256xf32>
    %62 = vector.extract_strided_slice %61 {offsets = [0, 0], sizes = [8, 128], strides = [1, 1]} : vector<8x256xf32> to vector<8x128xf32>
    %cst_30 = arith.constant 5.000000e-01 : f32
    %63 = vector.broadcast %cst_30 : f32 to vector<8x128xf32>
    %64 = arith.mulf %63, %62 : vector<8x128xf32>
    %65 = math.tanh %64 : vector<8x128xf32>
    %cst_31 = arith.constant 5.000000e-01 : f32
    %66 = vector.broadcast %cst_31 : f32 to vector<8x128xf32>
    %67 = arith.mulf %66, %65 : vector<8x128xf32>
    %cst_32 = arith.constant 5.000000e-01 : f32
    %68 = vector.broadcast %cst_32 : f32 to vector<8x128xf32>
    %69 = arith.subf %68, %67 : vector<8x128xf32>
    %70 = vector.extract_strided_slice %61 {offsets = [0, 128], sizes = [8, 128], strides = [1, 1]} : vector<8x256xf32> to vector<8x128xf32>
    %cst_33 = arith.constant 0.000000e+00 : f32
    %71 = vector.broadcast %cst_33 : f32 to vector<8x128xf32>
    %72 = arith.maximumf %70, %71 : vector<8x128xf32>
    %73 = arith.subf %72, %54 : vector<8x128xf32>
    %74 = arith.mulf %69, %73 : vector<8x128xf32>
    %75 = arith.addf %54, %74 : vector<8x128xf32>
    %c3_i32 = arith.constant 3 : i32
    %c8_i32_34 = arith.constant 8 : i32
    %76 = arith.muli %c3_i32, %c8_i32_34 : i32
    %77 = tpu.assume_multiple %76, 8 : i32
    %78 = arith.index_cast %77 : i32 to index
    %c0_35 = arith.constant 0 : index
    %79 = vector.load %arg10[%78, %c0_35] : memref<64x256xf32, #tpu.memory_space<vmem>>, vector<8x256xf32>
    %80 = arith.truncf %75 : vector<8x128xf32> to vector<8x128xbf16>
    %cst_36 = arith.constant dense<0.000000e+00> : vector<8x256xf32>
    %81 = tpu.matmul %80, %11, %cst_36 {dimension_numbers = #tpu.dot_dimension_numbers<[1], [0], [0], [1], [0, 0, 1, 1], [], []>} : vector<8x128xbf16>, vector<128x256xbf16>, vector<8x256xf32> -> vector<8x256xf32>
    %82 = arith.addf %79, %81 : vector<8x256xf32>
    %83 = vector.extract_strided_slice %82 {offsets = [0, 0], sizes = [8, 128], strides = [1, 1]} : vector<8x256xf32> to vector<8x128xf32>
    %cst_37 = arith.constant 5.000000e-01 : f32
    %84 = vector.broadcast %cst_37 : f32 to vector<8x128xf32>
    %85 = arith.mulf %84, %83 : vector<8x128xf32>
    %86 = math.tanh %85 : vector<8x128xf32>
    %cst_38 = arith.constant 5.000000e-01 : f32
    %87 = vector.broadcast %cst_38 : f32 to vector<8x128xf32>
    %88 = arith.mulf %87, %86 : vector<8x128xf32>
    %cst_39 = arith.constant 5.000000e-01 : f32
    %89 = vector.broadcast %cst_39 : f32 to vector<8x128xf32>
    %90 = arith.subf %89, %88 : vector<8x128xf32>
    %91 = vector.extract_strided_slice %82 {offsets = [0, 128], sizes = [8, 128], strides = [1, 1]} : vector<8x256xf32> to vector<8x128xf32>
    %cst_40 = arith.constant 0.000000e+00 : f32
    %92 = vector.broadcast %cst_40 : f32 to vector<8x128xf32>
    %93 = arith.maximumf %91, %92 : vector<8x128xf32>
    %94 = arith.subf %93, %75 : vector<8x128xf32>
    %95 = arith.mulf %90, %94 : vector<8x128xf32>
    %96 = arith.addf %75, %95 : vector<8x128xf32>
    %c4_i32 = arith.constant 4 : i32
    %c8_i32_41 = arith.constant 8 : i32
    %97 = arith.muli %c4_i32, %c8_i32_41 : i32
    %98 = tpu.assume_multiple %97, 8 : i32
    %99 = arith.index_cast %98 : i32 to index
    %c0_42 = arith.constant 0 : index
    %100 = vector.load %arg10[%99, %c0_42] : memref<64x256xf32, #tpu.memory_space<vmem>>, vector<8x256xf32>
    %101 = arith.truncf %96 : vector<8x128xf32> to vector<8x128xbf16>
    %cst_43 = arith.constant dense<0.000000e+00> : vector<8x256xf32>
    %102 = tpu.matmul %101, %11, %cst_43 {dimension_numbers = #tpu.dot_dimension_numbers<[1], [0], [0], [1], [0, 0, 1, 1], [], []>} : vector<8x128xbf16>, vector<128x256xbf16>, vector<8x256xf32> -> vector<8x256xf32>
    %103 = arith.addf %100, %102 : vector<8x256xf32>
    %104 = vector.extract_strided_slice %103 {offsets = [0, 0], sizes = [8, 128], strides = [1, 1]} : vector<8x256xf32> to vector<8x128xf32>
    %cst_44 = arith.constant 5.000000e-01 : f32
    %105 = vector.broadcast %cst_44 : f32 to vector<8x128xf32>
    %106 = arith.mulf %105, %104 : vector<8x128xf32>
    %107 = math.tanh %106 : vector<8x128xf32>
    %cst_45 = arith.constant 5.000000e-01 : f32
    %108 = vector.broadcast %cst_45 : f32 to vector<8x128xf32>
    %109 = arith.mulf %108, %107 : vector<8x128xf32>
    %cst_46 = arith.constant 5.000000e-01 : f32
    %110 = vector.broadcast %cst_46 : f32 to vector<8x128xf32>
    %111 = arith.subf %110, %109 : vector<8x128xf32>
    %112 = vector.extract_strided_slice %103 {offsets = [0, 128], sizes = [8, 128], strides = [1, 1]} : vector<8x256xf32> to vector<8x128xf32>
    %cst_47 = arith.constant 0.000000e+00 : f32
    %113 = vector.broadcast %cst_47 : f32 to vector<8x128xf32>
    %114 = arith.maximumf %112, %113 : vector<8x128xf32>
    %115 = arith.subf %114, %96 : vector<8x128xf32>
    %116 = arith.mulf %111, %115 : vector<8x128xf32>
    %117 = arith.addf %96, %116 : vector<8x128xf32>
    %c5_i32 = arith.constant 5 : i32
    %c8_i32_48 = arith.constant 8 : i32
    %118 = arith.muli %c5_i32, %c8_i32_48 : i32
    %119 = tpu.assume_multiple %118, 8 : i32
    %120 = arith.index_cast %119 : i32 to index
    %c0_49 = arith.constant 0 : index
    %121 = vector.load %arg10[%120, %c0_49] : memref<64x256xf32, #tpu.memory_space<vmem>>, vector<8x256xf32>
    %122 = arith.truncf %117 : vector<8x128xf32> to vector<8x128xbf16>
    %cst_50 = arith.constant dense<0.000000e+00> : vector<8x256xf32>
    %123 = tpu.matmul %122, %11, %cst_50 {dimension_numbers = #tpu.dot_dimension_numbers<[1], [0], [0], [1], [0, 0, 1, 1], [], []>} : vector<8x128xbf16>, vector<128x256xbf16>, vector<8x256xf32> -> vector<8x256xf32>
    %124 = arith.addf %121, %123 : vector<8x256xf32>
    %125 = vector.extract_strided_slice %124 {offsets = [0, 0], sizes = [8, 128], strides = [1, 1]} : vector<8x256xf32> to vector<8x128xf32>
    %cst_51 = arith.constant 5.000000e-01 : f32
    %126 = vector.broadcast %cst_51 : f32 to vector<8x128xf32>
    %127 = arith.mulf %126, %125 : vector<8x128xf32>
    %128 = math.tanh %127 : vector<8x128xf32>
    %cst_52 = arith.constant 5.000000e-01 : f32
    %129 = vector.broadcast %cst_52 : f32 to vector<8x128xf32>
    %130 = arith.mulf %129, %128 : vector<8x128xf32>
    %cst_53 = arith.constant 5.000000e-01 : f32
    %131 = vector.broadcast %cst_53 : f32 to vector<8x128xf32>
    %132 = arith.subf %131, %130 : vector<8x128xf32>
    %133 = vector.extract_strided_slice %124 {offsets = [0, 128], sizes = [8, 128], strides = [1, 1]} : vector<8x256xf32> to vector<8x128xf32>
    %cst_54 = arith.constant 0.000000e+00 : f32
    %134 = vector.broadcast %cst_54 : f32 to vector<8x128xf32>
    %135 = arith.maximumf %133, %134 : vector<8x128xf32>
    %136 = arith.subf %135, %117 : vector<8x128xf32>
    %137 = arith.mulf %132, %136 : vector<8x128xf32>
    %138 = arith.addf %117, %137 : vector<8x128xf32>
    %c6_i32 = arith.constant 6 : i32
    %c8_i32_55 = arith.constant 8 : i32
    %139 = arith.muli %c6_i32, %c8_i32_55 : i32
    %140 = tpu.assume_multiple %139, 8 : i32
    %141 = arith.index_cast %140 : i32 to index
    %c0_56 = arith.constant 0 : index
    %142 = vector.load %arg10[%141, %c0_56] : memref<64x256xf32, #tpu.memory_space<vmem>>, vector<8x256xf32>
    %143 = arith.truncf %138 : vector<8x128xf32> to vector<8x128xbf16>
    %cst_57 = arith.constant dense<0.000000e+00> : vector<8x256xf32>
    %144 = tpu.matmul %143, %11, %cst_57 {dimension_numbers = #tpu.dot_dimension_numbers<[1], [0], [0], [1], [0, 0, 1, 1], [], []>} : vector<8x128xbf16>, vector<128x256xbf16>, vector<8x256xf32> -> vector<8x256xf32>
    %145 = arith.addf %142, %144 : vector<8x256xf32>
    %146 = vector.extract_strided_slice %145 {offsets = [0, 0], sizes = [8, 128], strides = [1, 1]} : vector<8x256xf32> to vector<8x128xf32>
    %cst_58 = arith.constant 5.000000e-01 : f32
    %147 = vector.broadcast %cst_58 : f32 to vector<8x128xf32>
    %148 = arith.mulf %147, %146 : vector<8x128xf32>
    %149 = math.tanh %148 : vector<8x128xf32>
    %cst_59 = arith.constant 5.000000e-01 : f32
    %150 = vector.broadcast %cst_59 : f32 to vector<8x128xf32>
    %151 = arith.mulf %150, %149 : vector<8x128xf32>
    %cst_60 = arith.constant 5.000000e-01 : f32
    %152 = vector.broadcast %cst_60 : f32 to vector<8x128xf32>
    %153 = arith.subf %152, %151 : vector<8x128xf32>
    %154 = vector.extract_strided_slice %145 {offsets = [0, 128], sizes = [8, 128], strides = [1, 1]} : vector<8x256xf32> to vector<8x128xf32>
    %cst_61 = arith.constant 0.000000e+00 : f32
    %155 = vector.broadcast %cst_61 : f32 to vector<8x128xf32>
    %156 = arith.maximumf %154, %155 : vector<8x128xf32>
    %157 = arith.subf %156, %138 : vector<8x128xf32>
    %158 = arith.mulf %153, %157 : vector<8x128xf32>
    %159 = arith.addf %138, %158 : vector<8x128xf32>
    %c7_i32 = arith.constant 7 : i32
    %c8_i32_62 = arith.constant 8 : i32
    %160 = arith.muli %c7_i32, %c8_i32_62 : i32
    %161 = tpu.assume_multiple %160, 8 : i32
    %162 = arith.index_cast %161 : i32 to index
    %c0_63 = arith.constant 0 : index
    %163 = vector.load %arg10[%162, %c0_63] : memref<64x256xf32, #tpu.memory_space<vmem>>, vector<8x256xf32>
    %164 = arith.truncf %159 : vector<8x128xf32> to vector<8x128xbf16>
    %cst_64 = arith.constant dense<0.000000e+00> : vector<8x256xf32>
    %165 = tpu.matmul %164, %11, %cst_64 {dimension_numbers = #tpu.dot_dimension_numbers<[1], [0], [0], [1], [0, 0, 1, 1], [], []>} : vector<8x128xbf16>, vector<128x256xbf16>, vector<8x256xf32> -> vector<8x256xf32>
    %166 = arith.addf %163, %165 : vector<8x256xf32>
    %167 = vector.extract_strided_slice %166 {offsets = [0, 0], sizes = [8, 128], strides = [1, 1]} : vector<8x256xf32> to vector<8x128xf32>
    %cst_65 = arith.constant 5.000000e-01 : f32
    %168 = vector.broadcast %cst_65 : f32 to vector<8x128xf32>
    %169 = arith.mulf %168, %167 : vector<8x128xf32>
    %170 = math.tanh %169 : vector<8x128xf32>
    %cst_66 = arith.constant 5.000000e-01 : f32
    %171 = vector.broadcast %cst_66 : f32 to vector<8x128xf32>
    %172 = arith.mulf %171, %170 : vector<8x128xf32>
    %cst_67 = arith.constant 5.000000e-01 : f32
    %173 = vector.broadcast %cst_67 : f32 to vector<8x128xf32>
    %174 = arith.subf %173, %172 : vector<8x128xf32>
    %175 = vector.extract_strided_slice %166 {offsets = [0, 128], sizes = [8, 128], strides = [1, 1]} : vector<8x256xf32> to vector<8x128xf32>
    %cst_68 = arith.constant 0.000000e+00 : f32
    %176 = vector.broadcast %cst_68 : f32 to vector<8x128xf32>
    %177 = arith.maximumf %175, %176 : vector<8x128xf32>
    %178 = arith.subf %177, %159 : vector<8x128xf32>
    %179 = arith.mulf %174, %178 : vector<8x128xf32>
    %180 = arith.addf %159, %179 : vector<8x128xf32>
    %c8_i32_69 = arith.constant 8 : i32
    %c0_70 = arith.constant 0 : index
    %c0_71 = arith.constant 0 : index
    %181 = vector.load %arg9[%c0_70, %c0_71] : memref<8x128xf32, #tpu.memory_space<vmem>>, vector<8x128xf32>
    tpu.vector_store %arg9[%c0_70, %c0_71], %180 {strides = array<i32>} : memref<8x128xf32, #tpu.memory_space<vmem>>, vector<8x128xf32>,
    %c0_i32_72 = arith.constant 0 : i32
    %182 = arith.cmpi eq, %arg1, %c0_i32_72 : i32
    %183 = arith.extui %182 : i1 to i32
    %c0_i32_73 = arith.constant 0 : i32
    %184 = arith.cmpi ne, %183, %c0_i32_73 : i32
    scf.if %184 {
      %185 = arith.truncf %180 : vector<8x128xf32> to vector<8x128xbf16>
      %c0_74 = arith.constant 0 : index
      %c0_75 = arith.constant 0 : index
      %186 = vector.load %arg6[%c0_74, %c0_75] : memref<128x128xbf16, #tpu.memory_space<vmem>>, vector<128x128xbf16>
      %cst_76 = arith.constant dense<0.000000e+00> : vector<8x128xf32>
      %187 = tpu.matmul %185, %186, %cst_76 {dimension_numbers = #tpu.dot_dimension_numbers<[1], [0], [0], [1], [0, 0, 1, 1], [], []>} : vector<8x128xbf16>, vector<128x128xbf16>, vector<8x128xf32> -> vector<8x128xf32>
      %c0_77 = arith.constant 0 : index
      %c0_78 = arith.constant 0 : index
      %188 = vector.load %arg7[%c0_77, %c0_78] : memref<1x128xf32, #tpu.memory_space<vmem>>, vector<1x128xf32>
      %189 = vector.broadcast %188 : vector<1x128xf32> to vector<8x128xf32>
      %190 = arith.addf %187, %189 : vector<8x128xf32>
      %c0_79 = arith.constant 0 : index
      %c0_80 = arith.constant 0 : index
      %191 = vector.load %arg8[%c0_79, %c0_80] : memref<8x128xf32, #tpu.memory_space<vmem>>, vector<8x128xf32>
      tpu.vector_store %arg8[%c0_79, %c0_80], %190 {strides = array<i32>} : memref<8x128xf32, #tpu.memory_space<vmem>>, vector<8x128xf32>,
    } else {
    }
    return
  }
  func.func @transform_0(%arg0: i32, %arg1: i32) -> (i32, i32, i32) {
    %c0_i32 = arith.constant 0 : i32
    %c0_i32_0 = arith.constant 0 : i32
    return %arg1, %arg0, %c0_i32 : i32, i32, i32
  }
  func.func @transform_1(%arg0: i32, %arg1: i32) -> (i32, i32) {
    %c0_i32 = arith.constant 0 : i32
    %c0_i32_0 = arith.constant 0 : i32
    %c0_i32_1 = arith.constant 0 : i32
    return %c0_i32, %c0_i32_0 : i32, i32
  }
  func.func @transform_2(%arg0: i32, %arg1: i32) -> (i32, i32) {
    %c0_i32 = arith.constant 0 : i32
    %c0_i32_0 = arith.constant 0 : i32
    %c0_i32_1 = arith.constant 0 : i32
    return %c0_i32, %c0_i32_0 : i32, i32
  }
  func.func @transform_3(%arg0: i32, %arg1: i32) -> (i32, i32) {
    %c0_i32 = arith.constant 0 : i32
    %c0_i32_0 = arith.constant 0 : i32
    %c0_i32_1 = arith.constant 0 : i32
    return %c0_i32, %c0_i32_0 : i32, i32
  }
  func.func @transform_4(%arg0: i32, %arg1: i32) -> (i32, i32) {
    %c0_i32 = arith.constant 0 : i32
    %c0_i32_0 = arith.constant 0 : i32
    %c0_i32_1 = arith.constant 0 : i32
    return %c0_i32, %c0_i32_0 : i32, i32
  }
  func.func @transform_5(%arg0: i32, %arg1: i32) -> (i32, i32) {
    %c0_i32 = arith.constant 0 : i32
    %c0_i32_0 = arith.constant 0 : i32
    %c0_i32_1 = arith.constant 0 : i32
    return %c0_i32, %c0_i32_0 : i32, i32
  }
  func.func @transform_6(%arg0: i32, %arg1: i32) -> (i32, i32) {
    %c0_i32 = arith.constant 0 : i32
    %c0_i32_0 = arith.constant 0 : i32
    return %arg0, %c0_i32 : i32, i32
  }
}

</mosaic_0001>

<llo_original>
// kernel: gated_arch_forward.1
$region0: #{gated_arch_forward.1}
  #allocation0 [shape = 'u32[]', space=smem, size = 0x4, offset = 0x4, fixed_abs, tag = 'smem constant byte address 0x4 - core index']
  #allocation1 [shape = 'u32[144,128]{1,0:T(1,128)}', space=vmem, size = 0x12000, scoped, tag = 'internal scratch']
  #allocation2 [shape = 'f32[8,128]{1,0:T(8,128)}', space=vmem, size = 0x1000, scoped, tag = 'scratch operand']
  #allocation3 [shape = 'f32[64,256]{1,0:T(8,128)}', space=vmem, size = 0x10000, scoped, tag = 'scratch operand']
  %s0 = inlined_call_operand.vmem [shape: bf16[8,8,32], index: 0, kind: input, shape index: {}]
  %s1 = inlined_call_operand.vmem [shape: bf16[32,256], index: 1, kind: input, shape index: {}]
  %s2 = inlined_call_operand.vmem [shape: f32[1,256], index: 2, kind: input, shape index: {}]
  %s3 = inlined_call_operand.vmem [shape: bf16[128,256], index: 3, kind: input, shape index: {}]
  %s4 = inlined_call_operand.vmem [shape: bf16[128,128], index: 4, kind: input, shape index: {}]
  %s5 = inlined_call_operand.vmem [shape: f32[1,128], index: 5, kind: input, shape index: {}]
  %s6 = inlined_call_operand.hbm [shape: f32[8,128], index: 6, kind: output, shape index: {}]
  %s7 = sld [smem:[#allocation0]]
  $region42: #{gated_arch_forward.1} parent=0
    _
  %s9 = ssub.s32 1, %s7
  %s10 = scalar_select 0, %s9, %s7
  $region1: #{gated_arch_forward.1} parent=0
    #allocation4 [shape = 'u8[4096]{0}', space=vmem, size = 0x1000, scoped, tag = 'output window, operand 0, single buffered']
    #allocation5 [shape = 's32[1]{0}', space=sflag, size = 0x4, scoped, tag = 'scoped memory for gated_arch_forward.1']
    %11 = vsyncpa [#allocation5], 0
    // Predicated region
    $region2: #{gated_arch_forward.1} parent=1 // pred_check
      _
    $region3: #{gated_arch_forward.1} parent=1 // pred_check_branch
      %13 = sbr.rel (0) target = $region5
    $region4: #{gated_arch_forward.1} parent=1 // pred_region
      _
    $region5: #{gated_arch_forward.1} parent=1 // pred_fallthru
      _
    // Predicated region
    $region6: #{gated_arch_forward.1} parent=1 // pred_check
      _
    $region7: #{gated_arch_forward.1} parent=1 // pred_check_branch
      %15 = sbr.rel (0) target = $region9
    $region8: #{gated_arch_forward.1} parent=1 // pred_region
      _
    $region9: #{gated_arch_forward.1} parent=1 // pred_fallthru
      _
    // Predicated region
    $region10: #{gated_arch_forward.1} parent=1 // pred_check
      _
    $region11: #{gated_arch_forward.1} parent=1 // pred_check_branch
      %17 = sbr.rel (0) target = $region13
    $region12: #{gated_arch_forward.1} parent=1 // pred_region
      _
    $region13: #{gated_arch_forward.1} parent=1 // pred_fallthru
      _
    // Predicated region
    $region14: #{gated_arch_forward.1} parent=1 // pred_check
      _
    $region15: #{gated_arch_forward.1} parent=1 // pred_check_branch
      %19 = sbr.rel (0) target = $region17
    $region16: #{gated_arch_forward.1} parent=1 // pred_region
      _
    $region17: #{gated_arch_forward.1} parent=1 // pred_fallthru
      _
    // Predicated region
    $region18: #{gated_arch_forward.1} parent=1 // pred_check
      _
    $region19: #{gated_arch_forward.1} parent=1 // pred_check_branch
      %21 = sbr.rel (0) target = $region21
    $region20: #{gated_arch_forward.1} parent=1 // pred_region
      _
    $region21: #{gated_arch_forward.1} parent=1 // pred_fallthru
      _
    // Predicated region
    $region22: #{gated_arch_forward.1} parent=1 // pred_check
      _
    $region23: #{gated_arch_forward.1} parent=1 // pred_check_branch
      %23 = sbr.rel (0) target = $region25
    $region24: #{gated_arch_forward.1} parent=1 // pred_region
      _
    $region25: #{gated_arch_forward.1} parent=1 // pred_fallthru
      _
    %p25 = scmp.eq.s32.totalorder 0, 0
    // Predicated region
    $region26: #{gated_arch_forward.1} parent=1 // pred_check
      %p26 = pneg %p25
    $region27: #{gated_arch_forward.1} parent=1 // pred_check_branch
      %28 = sbr.rel (%p26) target = $region29
    $region28: #{gated_arch_forward.1} parent=1 // pred_region
      %29 = vst [vmem:[#allocation2] sm:$0xff] 0.0
    $region29: #{gated_arch_forward.1} parent=1 // pred_fallthru
      _
    %v30 = vld [vmem:[%s0] sm:$0xf]
    %v31 = vld [vmem:[%s0 + $0x4] sm:$0xf]
    %v32 = vld [vmem:[%s0 + $0x8] sm:$0xf]
    %v33 = vld [vmem:[%s0 + $0xc] sm:$0xf]
    %v34 = vld [vmem:[%s0 + $0x10] sm:$0xf]
    %v35 = vld [vmem:[%s0 + $0x14] sm:$0xf]
    %v36 = vld [vmem:[%s0 + $0x18] sm:$0xf]
    %v37 = vld [vmem:[%s0 + $0x1c] sm:$0xf]
    %v38 = vld [vmem:[%s1] sm:$0xff]
    %v39 = vld [vmem:[%s1 + $0x8] sm:$0xff]
    %v40 = vld [vmem:[%s1 + $0x10] sm:$0xff]
    %v41 = vld [vmem:[%s1 + $0x18] sm:$0xff]
    %v42 = vld [vmem:[%s2] sm:$0x3]
    %v44 = vlaneseq
    %v45 = vshrl.u32 %v44, 7
    %v46 = vsub.s32 0, %v45
    %v47 = vrot.slane %v42, %v46
    %v48 = vlaneseq
    %v49 = vshrl.u32 %v48, 7
    %v50 = vsub.s32 1, %v49
    %v51 = vrot.slane %v42, %v50
    %v62 = vunpack.c.l.b16 %v30
    %v63 = vunpack.c.l.b16 %v31
    %v64 = vunpack.c.l.b16 %v32
    %v65 = vunpack.c.l.b16 %v33
    %v66 = vunpack.c.l.b16 %v34
    %v67 = vunpack.c.l.b16 %v35
    %v68 = vunpack.c.l.b16 %v36
    %v69 = vunpack.c.l.b16 %v37
    %v70 = vpack.c.b16 %v63, %v62
    %v71 = vpack.c.b16 %v65, %v64
    %v72 = vpack.c.b16 %v67, %v66
    %v73 = vpack.c.b16 %v69, %v68
    %v78 = vunpack.c.l.b16 %v38
    %v79 = vunpack.c.h.b16 %v38
    %v80 = vunpack.c.l.b16 %v39
    %v81 = vunpack.c.h.b16 %v39
    %v82 = vunpack.c.l.b16 %v40
    %v83 = vunpack.c.h.b16 %v40
    %v84 = vunpack.c.l.b16 %v41
    %v85 = vunpack.c.h.b16 %v41
    %v86 = vpack.c.b16 %v80, %v78
    %v87 = vpack.c.b16 %v81, %v79
    %v88 = vpack.c.b16 %v84, %v82
    %v89 = vpack.c.b16 %v85, %v83
    %vm94 = vcmask 261120
    %v96 = vsel %vm94, %v70, 0
    %v99 = vsel %vm94, %v71, 0
    %v102 = vsel %vm94, %v72, 0
    %v105 = vsel %vm94, %v73, 0
    %107 = vmatprep.subr.bf16.mxu0 %v87
    %108 = vmatpush1.bf16.msra.mxu0 %v86
    %109 = vmatprep.subr.bf16.mxu0 %v89
    %110 = vmatpush1.bf16.msra.mxu0 %v88
    %111 = vmatprep.subr.bf16.mxu0 0
    %112 = vmatpush1.bf16.msra.mxu0 0
    %113 = vmatprep.subr.bf16.mxu0 0
    %114 = vmatpush1.bf16.msra.mxu0 0
    %115 = vmatprep.subr.bf16.mxu0 0
    %116 = vmatpush1.bf16.msra.mxu0 0
    %117 = vmatprep.subr.bf16.mxu0 0
    %118 = vmatpush1.bf16.msra.mxu0 0
    %119 = vmatprep.subr.bf16.mxu0 0
    %120 = vmatpush1.bf16.msra.mxu0 0
    %121 = vmatprep.subr.bf16.mxu0 0
    %122 = vmatpush1.bf16.msra.mxu0 0
    %123 = vmatprep.subr.bf16.mxu0 0
    %124 = vmatpush1.bf16.msra.mxu0 0
    %125 = vmatprep.subr.bf16.mxu0 0
    %126 = vmatpush1.bf16.msra.mxu0 0
    %127 = vmatprep.subr.bf16.mxu0 0
    %128 = vmatpush1.bf16.msra.mxu0 0
    %129 = vmatprep.subr.bf16.mxu0 0
    %130 = vmatpush1.bf16.msra.mxu0 0
    %131 = vmatprep.subr.bf16.mxu0 0
    %132 = vmatpush1.bf16.msra.mxu0 0
    %133 = vmatprep.subr.bf16.mxu0 0
    %134 = vmatpush1.bf16.msra.mxu0 0
    %135 = vmatprep.subr.bf16.mxu0 0
    %136 = vmatpush1.bf16.msra.mxu0 0
    %137 = vmatprep.subr.bf16.mxu0 0
    %138 = vmatpush1.bf16.msra.mxu0 0
    %139 = vmatprep.mubr.bf16.mxu0 0
    %140 = vmatmul.mubr.bf16.gmra.mrb[0].mxu0 %v96
    %v141 = vpop.f32.mrb[0].mxu0
    %v142 = vadd.f32 %v47, %v141
    %v143 = vpop.f32.mrb[0].mxu0
    %v144 = vadd.f32 %v51, %v143
    %v145 = vpop.f32.mrb[0].mxu0
    %v146 = vadd.f32 %v47, %v145
    %v147 = vpop.f32.mrb[0].mxu0
    %v148 = vadd.f32 %v51, %v147
    %149 = vmatprep.mubr.bf16.mxu0 0
    %150 = vmatmul.mubr.bf16.gmra.mrb[0].mxu0 %v99
    %v151 = vpop.f32.mrb[0].mxu0
    %v152 = vadd.f32 %v47, %v151
    %v153 = vpop.f32.mrb[0].mxu0
    %v154 = vadd.f32 %v51, %v153
    %v155 = vpop.f32.mrb[0].mxu0
    %v156 = vadd.f32 %v47, %v155
    %v157 = vpop.f32.mrb[0].mxu0
    %v158 = vadd.f32 %v51, %v157
    %159 = vmatprep.mubr.bf16.mxu0 0
    %160 = vmatmul.mubr.bf16.gmra.mrb[0].mxu0 %v102
    %v161 = vpop.f32.mrb[0].mxu0
    %v162 = vadd.f32 %v47, %v161
    %v163 = vpop.f32.mrb[0].mxu0
    %v164 = vadd.f32 %v51, %v163
    %v165 = vpop.f32.mrb[0].mxu0
    %v166 = vadd.f32 %v47, %v165
    %v167 = vpop.f32.mrb[0].mxu0
    %v168 = vadd.f32 %v51, %v167
    %169 = vmatprep.mubr.bf16.mxu0 0
    %170 = vmatmul.mubr.bf16.gmra.mrb[0].mxu0 %v105
    %v171 = vpop.f32.mrb[0].mxu0
    %v172 = vadd.f32 %v47, %v171
    %v173 = vpop.f32.mrb[0].mxu0
    %v174 = vadd.f32 %v51, %v173
    %v175 = vpop.f32.mrb[0].mxu0
    %v176 = vadd.f32 %v47, %v175
    %v177 = vpop.f32.mrb[0].mxu0
    %v178 = vadd.f32 %v51, %v177
    %179 = vdwg.mxu0
    %180 = vst [vmem:[#allocation3] sm:$0xff] %v142
    %181 = vst [vmem:[#allocation3 + $0x8] sm:$0xff] %v144
    %182 = vst [vmem:[#allocation3 + $0x10] sm:$0xff] %v146
    %183 = vst [vmem:[#allocation3 + $0x18] sm:$0xff] %v148
    %184 = vst [vmem:[#allocation3 + $0x20] sm:$0xff] %v152
    %185 = vst [vmem:[#allocation3 + $0x28] sm:$0xff] %v154
    %186 = vst [vmem:[#allocation3 + $0x30] sm:$0xff] %v156
    %187 = vst [vmem:[#allocation3 + $0x38] sm:$0xff] %v158
    %188 = vst [vmem:[#allocation3 + $0x40] sm:$0xff] %v162
    %189 = vst [vmem:[#allocation3 + $0x48] sm:$0xff] %v164
    %190 = vst [vmem:[#allocation3 + $0x50] sm:$0xff] %v166
    %191 = vst [vmem:[#allocation3 + $0x58] sm:$0xff] %v168
    %192 = vst [vmem:[#allocation3 + $0x60] sm:$0xff] %v172
    %193 = vst [vmem:[#allocation3 + $0x68] sm:$0xff] %v174
    %194 = vst [vmem:[#allocation3 + $0x70] sm:$0xff] %v176
    %195 = vst [vmem:[#allocation3 + $0x78] sm:$0xff] %v178
    %v196 = vld [vmem:[%s3] sm:$0xff]
    %v197 = vld [vmem:[%s3 + $0x8] sm:$0xff]
    %v198 = vld [vmem:[%s3 + $0x10] sm:$0xff]
    %v199 = vld [vmem:[%s3 + $0x18] sm:$0xff]
    %v200 = vld [vmem:[%s3 + $0x20] sm:$0xff]
    %v201 = vld [vmem:[%s3 + $0x28] sm:$0xff]
    %v202 = vld [vmem:[%s3 + $0x30] sm:$0xff]
    %v203 = vld [vmem:[%s3 + $0x38] sm:$0xff]
    %v204 = vld [vmem:[%s3 + $0x40] sm:$0xff]
    %v205 = vld [vmem:[%s3 + $0x48] sm:$0xff]
    %v206 = vld [vmem:[%s3 + $0x50] sm:$0xff]
    %v207 = vld [vmem:[%s3 + $0x58] sm:$0xff]
    %v208 = vld [vmem:[%s3 + $0x60] sm:$0xff]
    %v209 = vld [vmem:[%s3 + $0x68] sm:$0xff]
    %v210 = vld [vmem:[%s3 + $0x70] sm:$0xff]
    %v211 = vld [vmem:[%s3 + $0x78] sm:$0xff]
    %v212 = vld [vmem:[#allocation2] sm:$0xff]
    %s213 = smul.u32 0, 2
    %s214 = smul.addr %s213, 8
    %s215 = scalar_lea.vmem [#allocation3], %s214
    %v216 = vld [vmem:[%s215] sm:$0xff]
    %v217 = vld [vmem:[%s215 + $0x8] sm:$0xff]
    %v218 = vpack.c.bf16 %v212, %v212
    %v235 = vunpack.c.l.b16 %v196
    %v236 = vunpack.c.h.b16 %v196
    %v237 = vunpack.c.l.b16 %v197
    %v238 = vunpack.c.h.b16 %v197
    %v239 = vunpack.c.l.b16 %v198
    %v240 = vunpack.c.h.b16 %v198
    %v241 = vunpack.c.l.b16 %v199
    %v242 = vunpack.c.h.b16 %v199
    %v243 = vunpack.c.l.b16 %v200
    %v244 = vunpack.c.h.b16 %v200
    %v245 = vunpack.c.l.b16 %v201
    %v246 = vunpack.c.h.b16 %v201
    %v247 = vunpack.c.l.b16 %v202
    %v248 = vunpack.c.h.b16 %v202
    %v249 = vunpack.c.l.b16 %v203
    %v250 = vunpack.c.h.b16 %v203
    %v251 = vunpack.c.l.b16 %v204
    %v252 = vunpack.c.h.b16 %v204
    %v253 = vunpack.c.l.b16 %v205
    %v254 = vunpack.c.h.b16 %v205
    %v255 = vunpack.c.l.b16 %v206
    %v256 = vunpack.c.h.b16 %v206
    %v257 = vunpack.c.l.b16 %v207
    %v258 = vunpack.c.h.b16 %v207
    %v259 = vunpack.c.l.b16 %v208
    %v260 = vunpack.c.h.b16 %v208
    %v261 = vunpack.c.l.b16 %v209
    %v262 = vunpack.c.h.b16 %v209
    %v263 = vunpack.c.l.b16 %v210
    %v264 = vunpack.c.h.b16 %v210
    %v265 = vunpack.c.l.b16 %v211
    %v266 = vunpack.c.h.b16 %v211
    %v267 = vpack.c.b16 %v237, %v235
    %v268 = vpack.c.b16 %v238, %v236
    %v269 = vpack.c.b16 %v241, %v239
    %v270 = vpack.c.b16 %v242, %v240
    %v271 = vpack.c.b16 %v245, %v243
    %v272 = vpack.c.b16 %v246, %v244
    %v273 = vpack.c.b16 %v249, %v247
    %v274 = vpack.c.b16 %v250, %v248
    %v275 = vpack.c.b16 %v253, %v251
    %v276 = vpack.c.b16 %v254, %v252
    %v277 = vpack.c.b16 %v257, %v255
    %v278 = vpack.c.b16 %v258, %v256
    %v279 = vpack.c.b16 %v261, %v259
    %v280 = vpack.c.b16 %v262, %v260
    %v281 = vpack.c.b16 %v265, %v263
    %v282 = vpack.c.b16 %v266, %v264
    %299 = vmatprep.subr.bf16.mxu0 %v268
    %300 = vmatpush1.bf16.msra.mxu0 %v267
    %301 = vmatprep.subr.bf16.mxu0 %v270
    %302 = vmatpush1.bf16.msra.mxu0 %v269
    %303 = vmatprep.subr.bf16.mxu0 %v272
    %304 = vmatpush1.bf16.msra.mxu0 %v271
    %305 = vmatprep.subr.bf16.mxu0 %v274
    %306 = vmatpush1.bf16.msra.mxu0 %v273
    %307 = vmatprep.subr.bf16.mxu0 %v276
    %308 = vmatpush1.bf16.msra.mxu0 %v275
    %309 = vmatprep.subr.bf16.mxu0 %v278
    %310 = vmatpush1.bf16.msra.mxu0 %v277
    %311 = vmatprep.subr.bf16.mxu0 %v280
    %312 = vmatpush1.bf16.msra.mxu0 %v279
    %313 = vmatprep.subr.bf16.mxu0 %v282
    %314 = vmatpush1.bf16.msra.mxu0 %v281
    %315 = vmatprep.subr.bf16.mxu0 0
    %316 = vmatpush1.bf16.msra.mxu0 0
    %317 = vmatprep.subr.bf16.mxu0 0
    %318 = vmatpush1.bf16.msra.mxu0 0
    %319 = vmatprep.subr.bf16.mxu0 0
    %320 = vmatpush1.bf16.msra.mxu0 0
    %321 = vmatprep.subr.bf16.mxu0 0
    %322 = vmatpush1.bf16.msra.mxu0 0
    %323 = vmatprep.subr.bf16.mxu0 0
    %324 = vmatpush1.bf16.msra.mxu0 0
    %325 = vmatprep.subr.bf16.mxu0 0
    %326 = vmatpush1.bf16.msra.mxu0 0
    %327 = vmatprep.subr.bf16.mxu0 0
    %328 = vmatpush1.bf16.msra.mxu0 0
    %329 = vmatprep.subr.bf16.mxu0 0
    %330 = vmatpush1.bf16.msra.mxu0 0
    %331 = vmatprep.mubr.bf16.mxu0 0
    %332 = vmatmul.mubr.bf16.gmra.mrb[0].mxu0 %v218
    %v333 = vpop.f32.mrb[0].mxu0
    %v334 = vadd.f32 0.0, %v333
    %v335 = vpop.f32.mrb[0].mxu0
    %v336 = vadd.f32 0.0, %v335
    %v337 = vpop.f32.mrb[0].mxu0
    %v338 = vpop.f32.mrb[0].mxu0
    %339 = vdwg.mxu0
    %v340 = vadd.f32 %v216, %v334
    %v341 = vadd.f32 %v217, %v336
    %v342 = vmul.f32 %v340, 0.5
    %v343 = vtanh.pop %v342
    %v344 = vmul.f32 %v343, 0.5
    %v345 = vsub.f32 0.5, %v344
    %v346 = vmax.f32 %v341, 0.0
    %v347 = vsub.f32 %v346, %v212
    %v348 = vmul.f32 %v345, %v347
    %v349 = vadd.f32 %v212, %v348
    %s350 = smul.u32 1, 2
    %s351 = smul.addr %s350, 8
    %s352 = scalar_lea.vmem [#allocation3], %s351
    %v353 = vld [vmem:[%s352] sm:$0xff]
    %v354 = vld [vmem:[%s352 + $0x8] sm:$0xff]
    %v355 = vpack.c.bf16 %v349, %v349
    %356 = vmatprep.subr.bf16.mxu0 %v268
    %357 = vmatpush1.bf16.msra.mxu0 %v267
    %358 = vmatprep.subr.bf16.mxu0 %v270
    %359 = vmatpush1.bf16.msra.mxu0 %v269
    %360 = vmatprep.subr.bf16.mxu0 %v272
    %361 = vmatpush1.bf16.msra.mxu0 %v271
    %362 = vmatprep.subr.bf16.mxu0 %v274
    %363 = vmatpush1.bf16.msra.mxu0 %v273
    %364 = vmatprep.subr.bf16.mxu0 %v276
    %365 = vmatpush1.bf16.msra.mxu0 %v275
    %366 = vmatprep.subr.bf16.mxu0 %v278
    %367 = vmatpush1.bf16.msra.mxu0 %v277
    %368 = vmatprep.subr.bf16.mxu0 %v280
    %369 = vmatpush1.bf16.msra.mxu0 %v279
    %370 = vmatprep.subr.bf16.mxu0 %v282
    %371 = vmatpush1.bf16.msra.mxu0 %v281
    %372 = vmatprep.subr.bf16.mxu0 0
    %373 = vmatpush1.bf16.msra.mxu0 0
    %374 = vmatprep.subr.bf16.mxu0 0
    %375 = vmatpush1.bf16.msra.mxu0 0
    %376 = vmatprep.subr.bf16.mxu0 0
    %377 = vmatpush1.bf16.msra.mxu0 0
    %378 = vmatprep.subr.bf16.mxu0 0
    %379 = vmatpush1.bf16.msra.mxu0 0
    %380 = vmatprep.subr.bf16.mxu0 0
    %381 = vmatpush1.bf16.msra.mxu0 0
    %382 = vmatprep.subr.bf16.mxu0 0
    %383 = vmatpush1.bf16.msra.mxu0 0
    %384 = vmatprep.subr.bf16.mxu0 0
    %385 = vmatpush1.bf16.msra.mxu0 0
    %386 = vmatprep.subr.bf16.mxu0 0
    %387 = vmatpush1.bf16.msra.mxu0 0
    %388 = vmatprep.mubr.bf16.mxu0 0
    %389 = vmatmul.mubr.bf16.gmra.mrb[0].mxu0 %v355
    %v390 = vpop.f32.mrb[0].mxu0
    %v391 = vadd.f32 0.0, %v390
    %v392 = vpop.f32.mrb[0].mxu0
    %v393 = vadd.f32 0.0, %v392
    %v394 = vpop.f32.mrb[0].mxu0
    %v395 = vpop.f32.mrb[0].mxu0
    %396 = vdwg.mxu0
    %v397 = vadd.f32 %v353, %v391
    %v398 = vadd.f32 %v354, %v393
    %v399 = vmul.f32 %v397, 0.5
    %v400 = vtanh.pop %v399
    %v401 = vmul.f32 %v400, 0.5
    %v402 = vsub.f32 0.5, %v401
    %v403 = vmax.f32 %v398, 0.0
    %v404 = vsub.f32 %v403, %v349
    %v405 = vmul.f32 %v402, %v404
    %v406 = vadd.f32 %v349, %v405
    %s407 = smul.u32 2, 2
    %s408 = smul.addr %s407, 8
    %s409 = scalar_lea.vmem [#allocation3], %s408
    %v410 = vld [vmem:[%s409] sm:$0xff]
    %v411 = vld [vmem:[%s409 + $0x8] sm:$0xff]
    %v412 = vpack.c.bf16 %v406, %v406
    %413 = vmatprep.subr.bf16.mxu0 %v268
    %414 = vmatpush1.bf16.msra.mxu0 %v267
    %415 = vmatprep.subr.bf16.mxu0 %v270
    %416 = vmatpush1.bf16.msra.mxu0 %v269
    %417 = vmatprep.subr.bf16.mxu0 %v272
    %418 = vmatpush1.bf16.msra.mxu0 %v271
    %419 = vmatprep.subr.bf16.mxu0 %v274
    %420 = vmatpush1.bf16.msra.mxu0 %v273
    %421 = vmatprep.subr.bf16.mxu0 %v276
    %422 = vmatpush1.bf16.msra.mxu0 %v275
    %423 = vmatprep.subr.bf16.mxu0 %v278
    %424 = vmatpush1.bf16.msra.mxu0 %v277
    %425 = vmatprep.subr.bf16.mxu0 %v280
    %426 = vmatpush1.bf16.msra.mxu0 %v279
    %427 = vmatprep.subr.bf16.mxu0 %v282
    %428 = vmatpush1.bf16.msra.mxu0 %v281
    %429 = vmatprep.subr.bf16.mxu0 0
    %430 = vmatpush1.bf16.msra.mxu0 0
    %431 = vmatprep.subr.bf16.mxu0 0
    %432 = vmatpush1.bf16.msra.mxu0 0
    %433 = vmatprep.subr.bf16.mxu0 0
    %434 = vmatpush1.bf16.msra.mxu0 0
    %435 = vmatprep.subr.bf16.mxu0 0
    %436 = vmatpush1.bf16.msra.mxu0 0
    %437 = vmatprep.subr.bf16.mxu0 0
    %438 = vmatpush1.bf16.msra.mxu0 0
    %439 = vmatprep.subr.bf16.mxu0 0
    %440 = vmatpush1.bf16.msra.mxu0 0
    %441 = vmatprep.subr.bf16.mxu0 0
    %442 = vmatpush1.bf16.msra.mxu0 0
    %443 = vmatprep.subr.bf16.mxu0 0
    %444 = vmatpush1.bf16.msra.mxu0 0
    %445 = vmatprep.mubr.bf16.mxu0 0
    %446 = vmatmul.mubr.bf16.gmra.mrb[0].mxu0 %v412
    %v447 = vpop.f32.mrb[0].mxu0
    %v448 = vadd.f32 0.0, %v447
    %v449 = vpop.f32.mrb[0].mxu0
    %v450 = vadd.f32 0.0, %v449
    %v451 = vpop.f32.mrb[0].mxu0
    %v452 = vpop.f32.mrb[0].mxu0
    %453 = vdwg.mxu0
    %v454 = vadd.f32 %v410, %v448
    %v455 = vadd.f32 %v411, %v450
    %v456 = vmul.f32 %v454, 0.5
    %v457 = vtanh.pop %v456
    %v458 = vmul.f32 %v457, 0.5
    %v459 = vsub.f32 0.5, %v458
    %v460 = vmax.f32 %v455, 0.0
    %v461 = vsub.f32 %v460, %v406
    %v462 = vmul.f32 %v459, %v461
    %v463 = vadd.f32 %v406, %v462
    %s464 = smul.u32 3, 2
    %s465 = smul.addr %s464, 8
    %s466 = scalar_lea.vmem [#allocation3], %s465
    %v467 = vld [vmem:[%s466] sm:$0xff]
    %v468 = vld [vmem:[%s466 + $0x8] sm:$0xff]
    %v469 = vpack.c.bf16 %v463, %v463
    %470 = vmatprep.subr.bf16.mxu0 %v268
    %471 = vmatpush1.bf16.msra.mxu0 %v267
    %472 = vmatprep.subr.bf16.mxu0 %v270
    %473 = vmatpush1.bf16.msra.mxu0 %v269
    %474 = vmatprep.subr.bf16.mxu0 %v272
    %475 = vmatpush1.bf16.msra.mxu0 %v271
    %476 = vmatprep.subr.bf16.mxu0 %v274
    %477 = vmatpush1.bf16.msra.mxu0 %v273
    %478 = vmatprep.subr.bf16.mxu0 %v276
    %479 = vmatpush1.bf16.msra.mxu0 %v275
    %480 = vmatprep.subr.bf16.mxu0 %v278
    %481 = vmatpush1.bf16.msra.mxu0 %v277
    %482 = vmatprep.subr.bf16.mxu0 %v280
    %483 = vmatpush1.bf16.msra.mxu0 %v279
    %484 = vmatprep.subr.bf16.mxu0 %v282
    %485 = vmatpush1.bf16.msra.mxu0 %v281
    %486 = vmatprep.subr.bf16.mxu0 0
    %487 = vmatpush1.bf16.msra.mxu0 0
    %488 = vmatprep.subr.bf16.mxu0 0
    %489 = vmatpush1.bf16.msra.mxu0 0
    %490 = vmatprep.subr.bf16.mxu0 0
    %491 = vmatpush1.bf16.msra.mxu0 0
    %492 = vmatprep.subr.bf16.mxu0 0
    %493 = vmatpush1.bf16.msra.mxu0 0
    %494 = vmatprep.subr.bf16.mxu0 0
    %495 = vmatpush1.bf16.msra.mxu0 0
    %496 = vmatprep.subr.bf16.mxu0 0
    %497 = vmatpush1.bf16.msra.mxu0 0
    %498 = vmatprep.subr.bf16.mxu0 0
    %499 = vmatpush1.bf16.msra.mxu0 0
    %500 = vmatprep.subr.bf16.mxu0 0
    %501 = vmatpush1.bf16.msra.mxu0 0
    %502 = vmatprep.mubr.bf16.mxu0 0
    %503 = vmatmul.mubr.bf16.gmra.mrb[0].mxu0 %v469
    %v504 = vpop.f32.mrb[0].mxu0
    %v505 = vadd.f32 0.0, %v504
    %v506 = vpop.f32.mrb[0].mxu0
    %v507 = vadd.f32 0.0, %v506
    %v508 = vpop.f32.mrb[0].mxu0
    %v509 = vpop.f32.mrb[0].mxu0
    %510 = vdwg.mxu0
    %v511 = vadd.f32 %v467, %v505
    %v512 = vadd.f32 %v468, %v507
    %v513 = vmul.f32 %v511, 0.5
    %v514 = vtanh.pop %v513
    %v515 = vmul.f32 %v514, 0.5
    %v516 = vsub.f32 0.5, %v515
    %v517 = vmax.f32 %v512, 0.0
    %v518 = vsub.f32 %v517, %v463
    %v519 = vmul.f32 %v516, %v518
    %v520 = vadd.f32 %v463, %v519
    %s521 = smul.u32 4, 2
    %s522 = smul.addr %s521, 8
    %s523 = scalar_lea.vmem [#allocation3], %s522
    %v524 = vld [vmem:[%s523] sm:$0xff]
    %v525 = vld [vmem:[%s523 + $0x8] sm:$0xff]
    %v526 = vpack.c.bf16 %v520, %v520
    %527 = vmatprep.subr.bf16.mxu0 %v268
    %528 = vmatpush1.bf16.msra.mxu0 %v267
    %529 = vmatprep.subr.bf16.mxu0 %v270
    %530 = vmatpush1.bf16.msra.mxu0 %v269
    %531 = vmatprep.subr.bf16.mxu0 %v272
    %532 = vmatpush1.bf16.msra.mxu0 %v271
    %533 = vmatprep.subr.bf16.mxu0 %v274
    %534 = vmatpush1.bf16.msra.mxu0 %v273
    %535 = vmatprep.subr.bf16.mxu0 %v276
    %536 = vmatpush1.bf16.msra.mxu0 %v275
    %537 = vmatprep.subr.bf16.mxu0 %v278
    %538 = vmatpush1.bf16.msra.mxu0 %v277
    %539 = vmatprep.subr.bf16.mxu0 %v280
    %540 = vmatpush1.bf16.msra.mxu0 %v279
    %541 = vmatprep.subr.bf16.mxu0 %v282
    %542 = vmatpush1.bf16.msra.mxu0 %v281
    %543 = vmatprep.subr.bf16.mxu0 0
    %544 = vmatpush1.bf16.msra.mxu0 0
    %545 = vmatprep.subr.bf16.mxu0 0
    %546 = vmatpush1.bf16.msra.mxu0 0
    %547 = vmatprep.subr.bf16.mxu0 0
    %548 = vmatpush1.bf16.msra.mxu0 0
    %549 = vmatprep.subr.bf16.mxu0 0
    %550 = vmatpush1.bf16.msra.mxu0 0
    %551 = vmatprep.subr.bf16.mxu0 0
    %552 = vmatpush1.bf16.msra.mxu0 0
    %553 = vmatprep.subr.bf16.mxu0 0
    %554 = vmatpush1.bf16.msra.mxu0 0
    %555 = vmatprep.subr.bf16.mxu0 0
    %556 = vmatpush1.bf16.msra.mxu0 0
    %557 = vmatprep.subr.bf16.mxu0 0
    %558 = vmatpush1.bf16.msra.mxu0 0
    %559 = vmatprep.mubr.bf16.mxu0 0
    %560 = vmatmul.mubr.bf16.gmra.mrb[0].mxu0 %v526
    %v561 = vpop.f32.mrb[0].mxu0
    %v562 = vadd.f32 0.0, %v561
    %v563 = vpop.f32.mrb[0].mxu0
    %v564 = vadd.f32 0.0, %v563
    %v565 = vpop.f32.mrb[0].mxu0
    %v566 = vpop.f32.mrb[0].mxu0
    %567 = vdwg.mxu0
    %v568 = vadd.f32 %v524, %v562
    %v569 = vadd.f32 %v525, %v564
    %v570 = vmul.f32 %v568, 0.5
    %v571 = vtanh.pop %v570
    %v572 = vmul.f32 %v571, 0.5
    %v573 = vsub.f32 0.5, %v572
    %v574 = vmax.f32 %v569, 0.0
    %v575 = vsub.f32 %v574, %v520
    %v576 = vmul.f32 %v573, %v575
    %v577 = vadd.f32 %v520, %v576
    %s578 = smul.u32 5, 2
    %s579 = smul.addr %s578, 8
    %s580 = scalar_lea.vmem [#allocation3], %s579
    %v581 = vld [vmem:[%s580] sm:$0xff]
    %v582 = vld [vmem:[%s580 + $0x8] sm:$0xff]
    %v583 = vpack.c.bf16 %v577, %v577
    %584 = vmatprep.subr.bf16.mxu0 %v268
    %585 = vmatpush1.bf16.msra.mxu0 %v267
    %586 = vmatprep.subr.bf16.mxu0 %v270
    %587 = vmatpush1.bf16.msra.mxu0 %v269
    %588 = vmatprep.subr.bf16.mxu0 %v272
    %589 = vmatpush1.bf16.msra.mxu0 %v271
    %590 = vmatprep.subr.bf16.mxu0 %v274
    %591 = vmatpush1.bf16.msra.mxu0 %v273
    %592 = vmatprep.subr.bf16.mxu0 %v276
    %593 = vmatpush1.bf16.msra.mxu0 %v275
    %594 = vmatprep.subr.bf16.mxu0 %v278
    %595 = vmatpush1.bf16.msra.mxu0 %v277
    %596 = vmatprep.subr.bf16.mxu0 %v280
    %597 = vmatpush1.bf16.msra.mxu0 %v279
    %598 = vmatprep.subr.bf16.mxu0 %v282
    %599 = vmatpush1.bf16.msra.mxu0 %v281
    %600 = vmatprep.subr.bf16.mxu0 0
    %601 = vmatpush1.bf16.msra.mxu0 0
    %602 = vmatprep.subr.bf16.mxu0 0
    %603 = vmatpush1.bf16.msra.mxu0 0
    %604 = vmatprep.subr.bf16.mxu0 0
    %605 = vmatpush1.bf16.msra.mxu0 0
    %606 = vmatprep.subr.bf16.mxu0 0
    %607 = vmatpush1.bf16.msra.mxu0 0
    %608 = vmatprep.subr.bf16.mxu0 0
    %609 = vmatpush1.bf16.msra.mxu0 0
    %610 = vmatprep.subr.bf16.mxu0 0
    %611 = vmatpush1.bf16.msra.mxu0 0
    %612 = vmatprep.subr.bf16.mxu0 0
    %613 = vmatpush1.bf16.msra.mxu0 0
    %614 = vmatprep.subr.bf16.mxu0 0
    %615 = vmatpush1.bf16.msra.mxu0 0
    %616 = vmatprep.mubr.bf16.mxu0 0
    %617 = vmatmul.mubr.bf16.gmra.mrb[0].mxu0 %v583
    %v618 = vpop.f32.mrb[0].mxu0
    %v619 = vadd.f32 0.0, %v618
    %v620 = vpop.f32.mrb[0].mxu0
    %v621 = vadd.f32 0.0, %v620
    %v622 = vpop.f32.mrb[0].mxu0
    %v623 = vpop.f32.mrb[0].mxu0
    %624 = vdwg.mxu0
    %v625 = vadd.f32 %v581, %v619
    %v626 = vadd.f32 %v582, %v621
    %v627 = vmul.f32 %v625, 0.5
    %v628 = vtanh.pop %v627
    %v629 = vmul.f32 %v628, 0.5
    %v630 = vsub.f32 0.5, %v629
    %v631 = vmax.f32 %v626, 0.0
    %v632 = vsub.f32 %v631, %v577
    %v633 = vmul.f32 %v630, %v632
    %v634 = vadd.f32 %v577, %v633
    %s635 = smul.u32 6, 2
    %s636 = smul.addr %s635, 8
    %s637 = scalar_lea.vmem [#allocation3], %s636
    %v638 = vld [vmem:[%s637] sm:$0xff]
    %v639 = vld [vmem:[%s637 + $0x8] sm:$0xff]
    %v640 = vpack.c.bf16 %v634, %v634
    %641 = vmatprep.subr.bf16.mxu0 %v268
    %642 = vmatpush1.bf16.msra.mxu0 %v267
    %643 = vmatprep.subr.bf16.mxu0 %v270
    %644 = vmatpush1.bf16.msra.mxu0 %v269
    %645 = vmatprep.subr.bf16.mxu0 %v272
    %646 = vmatpush1.bf16.msra.mxu0 %v271
    %647 = vmatprep.subr.bf16.mxu0 %v274
    %648 = vmatpush1.bf16.msra.mxu0 %v273
    %649 = vmatprep.subr.bf16.mxu0 %v276
    %650 = vmatpush1.bf16.msra.mxu0 %v275
    %651 = vmatprep.subr.bf16.mxu0 %v278
    %652 = vmatpush1.bf16.msra.mxu0 %v277
    %653 = vmatprep.subr.bf16.mxu0 %v280
    %654 = vmatpush1.bf16.msra.mxu0 %v279
    %655 = vmatprep.subr.bf16.mxu0 %v282
    %656 = vmatpush1.bf16.msra.mxu0 %v281
    %657 = vmatprep.subr.bf16.mxu0 0
    %658 = vmatpush1.bf16.msra.mxu0 0
    %659 = vmatprep.subr.bf16.mxu0 0
    %660 = vmatpush1.bf16.msra.mxu0 0
    %661 = vmatprep.subr.bf16.mxu0 0
    %662 = vmatpush1.bf16.msra.mxu0 0
    %663 = vmatprep.subr.bf16.mxu0 0
    %664 = vmatpush1.bf16.msra.mxu0 0
    %665 = vmatprep.subr.bf16.mxu0 0
    %666 = vmatpush1.bf16.msra.mxu0 0
    %667 = vmatprep.subr.bf16.mxu0 0
    %668 = vmatpush1.bf16.msra.mxu0 0
    %669 = vmatprep.subr.bf16.mxu0 0
    %670 = vmatpush1.bf16.msra.mxu0 0
    %671 = vmatprep.subr.bf16.mxu0 0
    %672 = vmatpush1.bf16.msra.mxu0 0
    %673 = vmatprep.mubr.bf16.mxu0 0
    %674 = vmatmul.mubr.bf16.gmra.mrb[0].mxu0 %v640
    %v675 = vpop.f32.mrb[0].mxu0
    %v676 = vadd.f32 0.0, %v675
    %v677 = vpop.f32.mrb[0].mxu0
    %v678 = vadd.f32 0.0, %v677
    %v679 = vpop.f32.mrb[0].mxu0
    %v680 = vpop.f32.mrb[0].mxu0
    %681 = vdwg.mxu0
    %v682 = vadd.f32 %v638, %v676
    %v683 = vadd.f32 %v639, %v678
    %v684 = vmul.f32 %v682, 0.5
    %v685 = vtanh.pop %v684
    %v686 = vmul.f32 %v685, 0.5
    %v687 = vsub.f32 0.5, %v686
    %v688 = vmax.f32 %v683, 0.0
    %v689 = vsub.f32 %v688, %v634
    %v690 = vmul.f32 %v687, %v689
    %v691 = vadd.f32 %v634, %v690
    %s692 = smul.u32 7, 2
    %s693 = smul.addr %s692, 8
    %s694 = scalar_lea.vmem [#allocation3], %s693
    %v695 = vld [vmem:[%s694] sm:$0xff]
    %v696 = vld [vmem:[%s694 + $0x8] sm:$0xff]
    %v697 = vpack.c.bf16 %v691, %v691
    %698 = vmatprep.subr.bf16.mxu0 %v268
    %699 = vmatpush1.bf16.msra.mxu0 %v267
    %700 = vmatprep.subr.bf16.mxu0 %v270
    %701 = vmatpush1.bf16.msra.mxu0 %v269
    %702 = vmatprep.subr.bf16.mxu0 %v272
    %703 = vmatpush1.bf16.msra.mxu0 %v271
    %704 = vmatprep.subr.bf16.mxu0 %v274
    %705 = vmatpush1.bf16.msra.mxu0 %v273
    %706 = vmatprep.subr.bf16.mxu0 %v276
    %707 = vmatpush1.bf16.msra.mxu0 %v275
    %708 = vmatprep.subr.bf16.mxu0 %v278
    %709 = vmatpush1.bf16.msra.mxu0 %v277
    %710 = vmatprep.subr.bf16.mxu0 %v280
    %711 = vmatpush1.bf16.msra.mxu0 %v279
    %712 = vmatprep.subr.bf16.mxu0 %v282
    %713 = vmatpush1.bf16.msra.mxu0 %v281
    %714 = vmatprep.subr.bf16.mxu0 0
    %715 = vmatpush1.bf16.msra.mxu0 0
    %716 = vmatprep.subr.bf16.mxu0 0
    %717 = vmatpush1.bf16.msra.mxu0 0
    %718 = vmatprep.subr.bf16.mxu0 0
    %719 = vmatpush1.bf16.msra.mxu0 0
    %720 = vmatprep.subr.bf16.mxu0 0
    %721 = vmatpush1.bf16.msra.mxu0 0
    %722 = vmatprep.subr.bf16.mxu0 0
    %723 = vmatpush1.bf16.msra.mxu0 0
    %724 = vmatprep.subr.bf16.mxu0 0
    %725 = vmatpush1.bf16.msra.mxu0 0
    %726 = vmatprep.subr.bf16.mxu0 0
    %727 = vmatpush1.bf16.msra.mxu0 0
    %728 = vmatprep.subr.bf16.mxu0 0
    %729 = vmatpush1.bf16.msra.mxu0 0
    %730 = vmatprep.mubr.bf16.mxu0 0
    %731 = vmatmul.mubr.bf16.gmra.mrb[0].mxu0 %v697
    %v732 = vpop.f32.mrb[0].mxu0
    %v733 = vadd.f32 0.0, %v732
    %v734 = vpop.f32.mrb[0].mxu0
    %v735 = vadd.f32 0.0, %v734
    %v736 = vpop.f32.mrb[0].mxu0
    %v737 = vpop.f32.mrb[0].mxu0
    %738 = vdwg.mxu0
    %v739 = vadd.f32 %v695, %v733
    %v740 = vadd.f32 %v696, %v735
    %v741 = vmul.f32 %v739, 0.5
    %v742 = vtanh.pop %v741
    %v743 = vmul.f32 %v742, 0.5
    %v744 = vsub.f32 0.5, %v743
    %v745 = vmax.f32 %v740, 0.0
    %v746 = vsub.f32 %v745, %v691
    %v747 = vmul.f32 %v744, %v746
    %v748 = vadd.f32 %v691, %v747
    %749 = vst [vmem:[#allocation2] sm:$0xff] %v748
    // Predicated region
    $region30: #{gated_arch_forward.1} parent=1 // pred_check
      %p750 = pneg %p25
    $region31: #{gated_arch_forward.1} parent=1 // pred_check_branch
      %752 = sbr.rel (%p750) target = $region33
    $region32: #{gated_arch_forward.1} parent=1 // pred_region
      %v753 = vpack.c.bf16 %v748, %v748
      %v754 = vld [vmem:[%s4] sm:$0xf]
      %v755 = vld [vmem:[%s4 + $0x4] sm:$0xf]
      %v756 = vld [vmem:[%s4 + $0x8] sm:$0xf]
      %v757 = vld [vmem:[%s4 + $0xc] sm:$0xf]
      %v758 = vld [vmem:[%s4 + $0x10] sm:$0xf]
      %v759 = vld [vmem:[%s4 + $0x14] sm:$0xf]
      %v760 = vld [vmem:[%s4 + $0x18] sm:$0xf]
      %v761 = vld [vmem:[%s4 + $0x1c] sm:$0xf]
      %v762 = vld [vmem:[%s4 + $0x20] sm:$0xf]
      %v763 = vld [vmem:[%s4 + $0x24] sm:$0xf]
      %v764 = vld [vmem:[%s4 + $0x28] sm:$0xf]
      %v765 = vld [vmem:[%s4 + $0x2c] sm:$0xf]
      %v766 = vld [vmem:[%s4 + $0x30] sm:$0xf]
      %v767 = vld [vmem:[%s4 + $0x34] sm:$0xf]
      %v768 = vld [vmem:[%s4 + $0x38] sm:$0xf]
      %v769 = vld [vmem:[%s4 + $0x3c] sm:$0xf]
      %v770 = vld [vmem:[%s5] sm:$0x1]
      %v772 = vlaneseq
      %v773 = vshrl.u32 %v772, 7
      %v774 = vsub.s32 0, %v773
      %v775 = vrot.slane %v770, %v774
      %v793 = vunpack.c.l.b16 %v754
      %v794 = vunpack.c.l.b16 %v755
      %v795 = vunpack.c.l.b16 %v756
      %v796 = vunpack.c.l.b16 %v757
      %v797 = vunpack.c.l.b16 %v758
      %v798 = vunpack.c.l.b16 %v759
      %v799 = vunpack.c.l.b16 %v760
      %v800 = vunpack.c.l.b16 %v761
      %v801 = vunpack.c.l.b16 %v762
      %v802 = vunpack.c.l.b16 %v763
      %v803 = vunpack.c.l.b16 %v764
      %v804 = vunpack.c.l.b16 %v765
      %v805 = vunpack.c.l.b16 %v766
      %v806 = vunpack.c.l.b16 %v767
      %v807 = vunpack.c.l.b16 %v768
      %v808 = vunpack.c.l.b16 %v769
      %v809 = vpack.c.b16 %v794, %v793
      %v810 = vpack.c.b16 %v796, %v795
      %v811 = vpack.c.b16 %v798, %v797
      %v812 = vpack.c.b16 %v800, %v799
      %v813 = vpack.c.b16 %v802, %v801
      %v814 = vpack.c.b16 %v804, %v803
      %v815 = vpack.c.b16 %v806, %v805
      %v816 = vpack.c.b16 %v808, %v807
      %825 = vmatprep.subr.bf16.mxu0 0
      %826 = vmatpush1.bf16.msra.mxu0 %v809
      %827 = vmatprep.subr.bf16.mxu0 0
      %828 = vmatpush1.bf16.msra.mxu0 %v810
      %829 = vmatprep.subr.bf16.mxu0 0
      %830 = vmatpush1.bf16.msra.mxu0 %v811
      %831 = vmatprep.subr.bf16.mxu0 0
      %832 = vmatpush1.bf16.msra.mxu0 %v812
      %833 = vmatprep.subr.bf16.mxu0 0
      %834 = vmatpush1.bf16.msra.mxu0 %v813
      %835 = vmatprep.subr.bf16.mxu0 0
      %836 = vmatpush1.bf16.msra.mxu0 %v814
      %837 = vmatprep.subr.bf16.mxu0 0
      %838 = vmatpush1.bf16.msra.mxu0 %v815
      %839 = vmatprep.subr.bf16.mxu0 0
      %840 = vmatpush1.bf16.msra.mxu0 %v816
      %841 = vmatprep.subr.bf16.mxu0 0
      %842 = vmatpush1.bf16.msra.mxu0 0
      %843 = vmatprep.subr.bf16.mxu0 0
      %844 = vmatpush1.bf16.msra.mxu0 0
      %845 = vmatprep.subr.bf16.mxu0 0
      %846 = vmatpush1.bf16.msra.mxu0 0
      %847 = vmatprep.subr.bf16.mxu0 0
      %848 = vmatpush1.bf16.msra.mxu0 0
      %849 = vmatprep.subr.bf16.mxu0 0
      %850 = vmatpush1.bf16.msra.mxu0 0
      %851 = vmatprep.subr.bf16.mxu0 0
      %852 = vmatpush1.bf16.msra.mxu0 0
      %853 = vmatprep.subr.bf16.mxu0 0
      %854 = vmatpush1.bf16.msra.mxu0 0
      %855 = vmatprep.subr.bf16.mxu0 0
      %856 = vmatpush1.bf16.msra.mxu0 0
      %857 = vmatprep.mubr.bf16.mxu0 0
      %858 = vmatmul.mubr.bf16.gmra.mrb[0].mxu0 %v753
      %v859 = vpop.f32.mrb[0].mxu0
      %v860 = vadd.f32 %v775, %v859
      %v861 = vpop.f32.mrb[0].mxu0
      %v862 = vpop.f32.mrb[0].mxu0
      %v863 = vpop.f32.mrb[0].mxu0
      %864 = vdwg.mxu0
      %865 = vst [vmem:[#allocation4] sm:$0xff] %v860
    $region33: #{gated_arch_forward.1} parent=1 // pred_fallthru
      _
    // Predicated region
    $region34: #{gated_arch_forward.1} parent=1 // pred_check
      _
    $region35: #{gated_arch_forward.1} parent=1 // pred_check_branch
      %867 = sbr.rel (0) target = $region37
    $region36: #{gated_arch_forward.1} parent=1 // pred_region
      %s869 = ssub.s32 128, 128
      %870 = vsyncadd [#allocation5], %s869
      %s872 = sshll.u32 [#allocation4], 4
      %s873 = int_to_ptr.vmem [resolvable:$true] %s872
      %875 = dma.vmem_to_hbm [thread:$0]  %s873, 128, %s6, [#allocation5]
    $region37: #{gated_arch_forward.1} parent=1 // pred_fallthru
      _
    // Predicated region
    $region38: #{gated_arch_forward.1} parent=1 // pred_check
      _
    $region39: #{gated_arch_forward.1} parent=1 // pred_check_branch
      %877 = sbr.rel (0) target = $region41
    $region40: #{gated_arch_forward.1} parent=1 // pred_region
      %878 = dma.done [#allocation5], 128
    $region41: #{gated_arch_forward.1} parent=1 // pred_fallthru
      _
    %879 = vsyncpa [#allocation5], 1

</llo_original>
